<compile_context>
chip_gen: v5e
topology: v5e:2x2
jax: 0.10.0
libtpu: 0.0.40
codegen_flags: <defaults>
</compile_context>

<pallas_src>
import functools

import jax
import jax.numpy as jnp
from jax.experimental import pallas as pl
from jax.experimental.pallas import tpu as pltpu


def _adjoint_tile_kernel(y_ref, x0_ref, h_ref, out_ref):
    """out_tile = x0_tile + y @ H_tile   (streaming adjoint, one output tile)."""
    adj = jnp.dot(y_ref[...], h_ref[...],
                  preferred_element_type=jnp.float32)        # (B, tile_n) f32
    out_ref[...] = x0_ref[...] + adj


def _pick_tile(n, target=2048):
    """Largest 128-multiple divisor of n that is <= target (or n itself)."""
    if n <= target or n % 128 != 0:
        return n
    t = (target // 128) * 128
    while n % t:
        t -= 128
    return max(t, 128)


def orthogonal_tikhonov(x, x_0, H, mu, *, tile_n=None):
    """Orthogonal_Tikhonov step: x_0 + (1/(N+mu)) * (x - x_0 @ H^T) @ H."""
    B, M = x.shape
    Bn, N = x_0.shape
    assert Bn == B and H.shape == (M, N)

    x = jnp.asarray(x, jnp.float32)
    x_0 = jnp.asarray(x_0, jnp.float32)
    H = jnp.asarray(H, jnp.float32)
    mu_arr = jnp.asarray(mu, jnp.float32).reshape(-1)
    # TODO(synk): FO.N assumed to be the pixel count N (= x_0.shape[1]), as in
    # spyrit's Linear operator; verify against the real operator.
    gain = 1.0 / (jnp.float32(N) + mu_arr[0])

    # --- Residual hoisted out of the kernel (perf feedback): computed ONCE in
    # f32 (parity with the PyTorch reference), instead of once per output tile.
    r = x - jnp.dot(x_0, H.T, preferred_element_type=jnp.float32)   # (B, M)
    y = (r * gain).astype(jnp.bfloat16)                             # (B, M)

    # bf16 weights for the streaming adjoint (exact for +/-1 sensing patterns).
    h_bf = H.astype(jnp.bfloat16)

    if tile_n is None:
        tile_n = _pick_tile(N)
    assert N % tile_n == 0, f"tile_n={tile_n} must divide N={N}"
    num_tiles = N // tile_n

    # VMEM budget from the TILED footprint: double-buffered H slab + x0 tile +
    # out tile, resident y, plus headroom.  Capped at 32 MiB (v7x-safe).
    vmem_need = (2 * (M * tile_n * 2 + B * tile_n * 4 + B * tile_n * 4)
                 + 2 * B * M * 2 + (4 << 20))
    vmem_limit = int(min(max(vmem_need, 8 << 20), 32 << 20))

    return pl.pallas_call(
        _adjoint_tile_kernel,
        out_shape=jax.ShapeDtypeStruct((B, N), jnp.float32),
        grid=(num_tiles,),
        in_specs=[
            pl.BlockSpec((B, M), lambda j: (0, 0)),          # y    (small, resident)
            pl.BlockSpec((B, tile_n), lambda j: (0, j)),     # x_0  tile (streamed)
            pl.BlockSpec((M, tile_n), lambda j: (0, j)),     # H    slab (streamed)
        ],
        out_specs=pl.BlockSpec((B, tile_n), lambda j: (0, j)),
        compiler_params=pltpu.CompilerParams(
            dimension_semantics=("parallel",),
            vmem_limit_bytes=vmem_limit),
    )(y, x_0, h_bf)


def _reference(x, x_0, H, mu):
    """Pure-JAX f32 reference matching the PyTorch forward."""
    N = x_0.shape[1]
    r = x - x_0 @ H.T                    # FO.Forward_op(x_0)
    y = r * (1.0 / (N + mu))             # 1 / (FO.N + mu)
    return y @ H + x_0                   # FO.adjoint(y) + x_0


if __name__ == "__main__":
    # Shapes consistent with the module docstring (Hsub: [M, 32*32]).
    B, M, N = 8, 256, 1024
    mu = 0.1

    key = jax.random.PRNGKey(0)
    k_h, k_x, k_x0 = jax.random.split(key, 3)

    # Random +/-1 sensing matrix (Hadamard-like subsampled patterns, exact in bf16).
    H = jnp.where(jax.random.normal(k_h, (M, N)) >= 0.0, 1.0, -1.0).astype(jnp.float32)
    x = jax.random.normal(k_x, (B, M), dtype=jnp.float32)      # measurements
    x_0 = jax.random.normal(k_x0, (B, N), dtype=jnp.float32)   # previous estimate
    mu_param = jnp.array([mu], dtype=jnp.float32)              # learnable scalar

    ref = _reference(x, x_0, H, mu_param)

    # Default tile (N <= 2048 -> single grid step, no per-step overhead).
    out = jax.block_until_ready(orthogonal_tikhonov(x, x_0, H, mu_param))
    assert out.shape == (B, N) and out.dtype == jnp.float32
    err = jnp.max(jnp.abs(out - ref))
    assert jnp.allclose(out, ref, rtol=2e-2, atol=2e-2), f"max abs err {err}"

    # Multi-tile path: exercises the streaming (M, tile_n) H BlockSpec.
    out_tiled = jax.block_until_ready(
        orthogonal_tikhonov(x, x_0, H, mu_param, tile_n=256))
    err_t = jnp.max(jnp.abs(out_tiled - ref))
    assert jnp.allclose(out_tiled, ref, rtol=2e-2, atol=2e-2), f"max abs err {err_t}"

    print("KERNEL_OK")
</pallas_src>

<mosaic_0001>
module attributes {stable_mosaic.version = 11 : i64} {
  func.func @_adjoint_tile_kernel(%arg0: i32, %arg1: memref<8x256xbf16, #tpu.memory_space<vmem>>, %arg2: memref<8x1024xf32, #tpu.memory_space<vmem>>, %arg3: memref<256x1024xbf16, #tpu.memory_space<vmem>>, %arg4: memref<8x1024xf32, #tpu.memory_space<vmem>>) attributes {dimension_semantics = [#tpu.dimension_semantics<parallel>], iteration_bounds = array<i64: 1>, scalar_prefetch = 0 : i64, scratch_operands = 0 : i64, tpu.core_type = #tpu.core_type<tc>, window_params = [{pipeline_mode = #tpu.pipeline_mode<synchronous>, transform_indices = @transform_0, window_bounds = array<i64: 8, 256>}, {transform_indices = @transform_1, window_bounds = array<i64: 8, 1024>}, {transform_indices = @transform_2, window_bounds = array<i64: 256, 1024>}, {transform_indices = @transform_3, window_bounds = array<i64: 8, 1024>}]} {
    %c0 = arith.constant 0 : index
    %c0_0 = arith.constant 0 : index
    %0 = vector.load %arg1[%c0, %c0_0] : memref<8x256xbf16, #tpu.memory_space<vmem>>, vector<8x256xbf16>
    %c0_1 = arith.constant 0 : index
    %c0_2 = arith.constant 0 : index
    %1 = vector.load %arg3[%c0_1, %c0_2] : memref<256x1024xbf16, #tpu.memory_space<vmem>>, vector<256x1024xbf16>
    %cst = arith.constant dense<0.000000e+00> : vector<8x1024xf32>
    %2 = tpu.matmul %0, %1, %cst {dimension_numbers = #tpu.dot_dimension_numbers<[1], [0], [0], [1], [0, 0, 1, 1], [], []>} : vector<8x256xbf16>, vector<256x1024xbf16>, vector<8x1024xf32> -> vector<8x1024xf32>
    %c0_3 = arith.constant 0 : index
    %c0_4 = arith.constant 0 : index
    %3 = vector.load %arg2[%c0_3, %c0_4] : memref<8x1024xf32, #tpu.memory_space<vmem>>, vector<8x1024xf32>
    %4 = arith.addf %3, %2 : vector<8x1024xf32>
    %c0_5 = arith.constant 0 : index
    %c0_6 = arith.constant 0 : index
    %5 = vector.load %arg4[%c0_5, %c0_6] : memref<8x1024xf32, #tpu.memory_space<vmem>>, vector<8x1024xf32>
    tpu.vector_store %arg4[%c0_5, %c0_6], %4 {strides = array<i32>} : memref<8x1024xf32, #tpu.memory_space<vmem>>, vector<8x1024xf32>,
    return
  }
  func.func @transform_0(%arg0: i32) -> (i32, i32) {
    %c0_i32 = arith.constant 0 : i32
    %c0_i32_0 = arith.constant 0 : i32
    %c0_i32_1 = arith.constant 0 : i32
    return %c0_i32, %c0_i32_0 : i32, i32
  }
  func.func @transform_1(%arg0: i32) -> (i32, i32) {
    %c0_i32 = arith.constant 0 : i32
    %c0_i32_0 = arith.constant 0 : i32
    return %c0_i32, %arg0 : i32, i32
  }
  func.func @transform_2(%arg0: i32) -> (i32, i32) {
    %c0_i32 = arith.constant 0 : i32
    %c0_i32_0 = arith.constant 0 : i32
    return %c0_i32, %arg0 : i32, i32
  }
  func.func @transform_3(%arg0: i32) -> (i32, i32) {
    %c0_i32 = arith.constant 0 : i32
    %c0_i32_0 = arith.constant 0 : i32
    return %c0_i32, %arg0 : i32, i32
  }
}

</mosaic_0001>

<llo_original>
// kernel: tpu_custom_call.1
$region0: #{tpu_custom_call.1}
  #allocation0 [shape = 'u32[]', space=smem, size = 0x4, offset = 0x4, fixed_abs, tag = 'smem constant byte address 0x4 - core index']
  #allocation1 [shape = 'u32[72,128]{1,0:T(1,128)}', space=vmem, size = 0x9000, scoped, tag = 'internal scratch']
  %s0 = inlined_call_operand.hbm [shape: bf16[8,256], index: 0, kind: input, shape index: {}]
  %s1 = inlined_call_operand.hbm [shape: f32[8,1024], index: 1, kind: input, shape index: {}]
  %s2 = inlined_call_operand.hbm [shape: bf16[256,1024], index: 2, kind: input, shape index: {}]
  %s3 = inlined_call_operand.hbm [shape: f32[8,1024], index: 3, kind: output, shape index: {}]
  %s4 = sld [smem:[#allocation0]]
  $region34: #{tpu_custom_call.1} parent=0
    _
  %s6 = ssub.s32 1, %s4
  %s7 = scalar_select 0, %s6, %s4
  $region1: #{tpu_custom_call.1} parent=0
    #allocation2 [shape = 'u8[4096]{0}', space=vmem, size = 0x1000, scoped, tag = 'input window, operand 0, single buffered']
    #allocation3 [shape = 's32[1]{0}', space=sflag, size = 0x4, scoped, tag = 'scoped memory for tpu_custom_call.1']
    #allocation4 [shape = 's32[1]{0}', space=sflag, size = 0x4, scoped, tag = 'scoped memory for tpu_custom_call.1']
    #allocation5 [shape = 'u8[32768]{0}', space=vmem, size = 0x8000, scoped, tag = 'input window, operand 1, single buffered']
    #allocation6 [shape = 's32[1]{0}', space=sflag, size = 0x4, scoped, tag = 'scoped memory for tpu_custom_call.1']
    #allocation7 [shape = 'u8[524288]{0}', space=vmem, size = 0x80000, scoped, tag = 'input window, operand 2, single buffered']
    #allocation8 [shape = 'u8[32768]{0}', space=vmem, size = 0x8000, scoped, tag = 'output window, operand 0, single buffered']
    %8 = vsyncpa [#allocation3], 0
    %9 = vsyncpa [#allocation6], 0
    %10 = vsyncpa [#allocation4], 0
    // Predicated region
    $region2: #{tpu_custom_call.1} parent=1 // pred_check
      _
    $region3: #{tpu_custom_call.1} parent=1 // pred_check_branch
      %12 = sbr.rel (0) target = $region5
    $region4: #{tpu_custom_call.1} parent=1 // pred_region
      %14 = vsyncadd [#allocation3], 0
      %s16 = sshll.u32 %s0, 4
      %s17 = int_to_ptr.hbm [resolvable:$true] %s16
      %s18 = sshll.u32 [#allocation2], 4
      %s19 = int_to_ptr.vmem [resolvable:$true] %s18
      %21 = dma.hbm_to_vmem [thread:$0]  %s17, 128, %s19, [#allocation3]
    $region5: #{tpu_custom_call.1} parent=1 // pred_fallthru
      _
    // Predicated region
    $region6: #{tpu_custom_call.1} parent=1 // pred_check
      _
    $region7: #{tpu_custom_call.1} parent=1 // pred_check_branch
      %23 = sbr.rel (0) target = $region9
    $region8: #{tpu_custom_call.1} parent=1 // pred_region
      %25 = vsyncadd [#allocation6], 0
      %s27 = sshll.u32 %s1, 4
      %s28 = int_to_ptr.hbm [resolvable:$true] %s27
      %s29 = sshll.u32 [#allocation5], 4
      %s30 = int_to_ptr.vmem [resolvable:$true] %s29
      %32 = dma.hbm_to_vmem [thread:$0]  %s28, 1024, %s30, [#allocation6]
    $region9: #{tpu_custom_call.1} parent=1 // pred_fallthru
      _
    // Predicated region
    $region10: #{tpu_custom_call.1} parent=1 // pred_check
      _
    $region11: #{tpu_custom_call.1} parent=1 // pred_check_branch
      %34 = sbr.rel (0) target = $region13
    $region12: #{tpu_custom_call.1} parent=1 // pred_region
      %36 = vsyncadd [#allocation6], 0
      %s37 = sshll.u32 %s2, 4
      %s38 = int_to_ptr.hbm [resolvable:$true] %s37
      %s39 = sshll.u32 [#allocation7], 4
      %s40 = int_to_ptr.vmem [resolvable:$true] %s39
      %45 = dma.hbm_to_vmem [thread:$0]  %s38, 16384, %s40, [#allocation6], 512, 512, 32
    $region13: #{tpu_custom_call.1} parent=1 // pred_fallthru
      _
    // Predicated region
    $region14: #{tpu_custom_call.1} parent=1 // pred_check
      _
    $region15: #{tpu_custom_call.1} parent=1 // pred_check_branch
      %47 = sbr.rel (0) target = $region17
    $region16: #{tpu_custom_call.1} parent=1 // pred_region
      %49 = dma.done [#allocation3], 128
    $region17: #{tpu_custom_call.1} parent=1 // pred_fallthru
      _
    // Predicated region
    $region18: #{tpu_custom_call.1} parent=1 // pred_check
      _
    $region19: #{tpu_custom_call.1} parent=1 // pred_check_branch
      %51 = sbr.rel (0) target = $region21
    $region20: #{tpu_custom_call.1} parent=1 // pred_region
      %53 = dma.done [#allocation6], 1024
    $region21: #{tpu_custom_call.1} parent=1 // pred_fallthru
      _
    // Predicated region
    $region22: #{tpu_custom_call.1} parent=1 // pred_check
      _
    $region23: #{tpu_custom_call.1} parent=1 // pred_check_branch
      %55 = sbr.rel (0) target = $region25
    $region24: #{tpu_custom_call.1} parent=1 // pred_region
      %57 = dma.done [#allocation6], 16384
    $region25: #{tpu_custom_call.1} parent=1 // pred_fallthru
      _
    %v58 = vld [vmem:[#allocation2] sm:$0xff]
    %v59 = vld [vmem:[#allocation7] sm:$0xff]
    %v60 = vld [vmem:[#allocation7 + $0x8] sm:$0xff]
    %v61 = vld [vmem:[#allocation7 + $0x10] sm:$0xff]
    %v62 = vld [vmem:[#allocation7 + $0x18] sm:$0xff]
    %v63 = vld [vmem:[#allocation7 + $0x20] sm:$0xff]
    %v64 = vld [vmem:[#allocation7 + $0x28] sm:$0xff]
    %v65 = vld [vmem:[#allocation7 + $0x30] sm:$0xff]
    %v66 = vld [vmem:[#allocation7 + $0x38] sm:$0xff]
    %v67 = vld [vmem:[#allocation7 + $0x40] sm:$0xff]
    %v68 = vld [vmem:[#allocation7 + $0x48] sm:$0xff]
    %v69 = vld [vmem:[#allocation7 + $0x50] sm:$0xff]
    %v70 = vld [vmem:[#allocation7 + $0x58] sm:$0xff]
    %v71 = vld [vmem:[#allocation7 + $0x60] sm:$0xff]
    %v72 = vld [vmem:[#allocation7 + $0x68] sm:$0xff]
    %v73 = vld [vmem:[#allocation7 + $0x70] sm:$0xff]
    %v74 = vld [vmem:[#allocation7 + $0x78] sm:$0xff]
    %v75 = vld [vmem:[#allocation7 + $0x80] sm:$0xff]
    %v76 = vld [vmem:[#allocation7 + $0x88] sm:$0xff]
    %v77 = vld [vmem:[#allocation7 + $0x90] sm:$0xff]
    %v78 = vld [vmem:[#allocation7 + $0x98] sm:$0xff]
    %v79 = vld [vmem:[#allocation7 + $0xa0] sm:$0xff]
    %v80 = vld [vmem:[#allocation7 + $0xa8] sm:$0xff]
    %v81 = vld [vmem:[#allocation7 + $0xb0] sm:$0xff]
    %v82 = vld [vmem:[#allocation7 + $0xb8] sm:$0xff]
    %v83 = vld [vmem:[#allocation7 + $0xc0] sm:$0xff]
    %v84 = vld [vmem:[#allocation7 + $0xc8] sm:$0xff]
    %v85 = vld [vmem:[#allocation7 + $0xd0] sm:$0xff]
    %v86 = vld [vmem:[#allocation7 + $0xd8] sm:$0xff]
    %v87 = vld [vmem:[#allocation7 + $0xe0] sm:$0xff]
    %v88 = vld [vmem:[#allocation7 + $0xe8] sm:$0xff]
    %v89 = vld [vmem:[#allocation7 + $0xf0] sm:$0xff]
    %v90 = vld [vmem:[#allocation7 + $0xf8] sm:$0xff]
    %v91 = vld [vmem:[#allocation7 + $0x100] sm:$0xff]
    %v92 = vld [vmem:[#allocation7 + $0x108] sm:$0xff]
    %v93 = vld [vmem:[#allocation7 + $0x110] sm:$0xff]
    %v94 = vld [vmem:[#allocation7 + $0x118] sm:$0xff]
    %v95 = vld [vmem:[#allocation7 + $0x120] sm:$0xff]
    %v96 = vld [vmem:[#allocation7 + $0x128] sm:$0xff]
    %v97 = vld [vmem:[#allocation7 + $0x130] sm:$0xff]
    %v98 = vld [vmem:[#allocation7 + $0x138] sm:$0xff]
    %v99 = vld [vmem:[#allocation7 + $0x140] sm:$0xff]
    %v100 = vld [vmem:[#allocation7 + $0x148] sm:$0xff]
    %v101 = vld [vmem:[#allocation7 + $0x150] sm:$0xff]
    %v102 = vld [vmem:[#allocation7 + $0x158] sm:$0xff]
    %v103 = vld [vmem:[#allocation7 + $0x160] sm:$0xff]
    %v104 = vld [vmem:[#allocation7 + $0x168] sm:$0xff]
    %v105 = vld [vmem:[#allocation7 + $0x170] sm:$0xff]
    %v106 = vld [vmem:[#allocation7 + $0x178] sm:$0xff]
    %v107 = vld [vmem:[#allocation7 + $0x180] sm:$0xff]
    %v108 = vld [vmem:[#allocation7 + $0x188] sm:$0xff]
    %v109 = vld [vmem:[#allocation7 + $0x190] sm:$0xff]
    %v110 = vld [vmem:[#allocation7 + $0x198] sm:$0xff]
    %v111 = vld [vmem:[#allocation7 + $0x1a0] sm:$0xff]
    %v112 = vld [vmem:[#allocation7 + $0x1a8] sm:$0xff]
    %v113 = vld [vmem:[#allocation7 + $0x1b0] sm:$0xff]
    %v114 = vld [vmem:[#allocation7 + $0x1b8] sm:$0xff]
    %v115 = vld [vmem:[#allocation7 + $0x1c0] sm:$0xff]
    %v116 = vld [vmem:[#allocation7 + $0x1c8] sm:$0xff]
    %v117 = vld [vmem:[#allocation7 + $0x1d0] sm:$0xff]
    %v118 = vld [vmem:[#allocation7 + $0x1d8] sm:$0xff]
    %v119 = vld [vmem:[#allocation7 + $0x1e0] sm:$0xff]
    %v120 = vld [vmem:[#allocation7 + $0x1e8] sm:$0xff]
    %v121 = vld [vmem:[#allocation7 + $0x1f0] sm:$0xff]
    %v122 = vld [vmem:[#allocation7 + $0x1f8] sm:$0xff]
    %v123 = vld [vmem:[#allocation7 + $0x200] sm:$0xff]
    %v124 = vld [vmem:[#allocation7 + $0x208] sm:$0xff]
    %v125 = vld [vmem:[#allocation7 + $0x210] sm:$0xff]
    %v126 = vld [vmem:[#allocation7 + $0x218] sm:$0xff]
    %v127 = vld [vmem:[#allocation7 + $0x220] sm:$0xff]
    %v128 = vld [vmem:[#allocation7 + $0x228] sm:$0xff]
    %v129 = vld [vmem:[#allocation7 + $0x230] sm:$0xff]
    %v130 = vld [vmem:[#allocation7 + $0x238] sm:$0xff]
    %v131 = vld [vmem:[#allocation7 + $0x240] sm:$0xff]
    %v132 = vld [vmem:[#allocation7 + $0x248] sm:$0xff]
    %v133 = vld [vmem:[#allocation7 + $0x250] sm:$0xff]
    %v134 = vld [vmem:[#allocation7 + $0x258] sm:$0xff]
    %v135 = vld [vmem:[#allocation7 + $0x260] sm:$0xff]
    %v136 = vld [vmem:[#allocation7 + $0x268] sm:$0xff]
    %v137 = vld [vmem:[#allocation7 + $0x270] sm:$0xff]
    %v138 = vld [vmem:[#allocation7 + $0x278] sm:$0xff]
    %v139 = vld [vmem:[#allocation7 + $0x280] sm:$0xff]
    %v140 = vld [vmem:[#allocation7 + $0x288] sm:$0xff]
    %v141 = vld [vmem:[#allocation7 + $0x290] sm:$0xff]
    %v142 = vld [vmem:[#allocation7 + $0x298] sm:$0xff]
    %v143 = vld [vmem:[#allocation7 + $0x2a0] sm:$0xff]
    %v144 = vld [vmem:[#allocation7 + $0x2a8] sm:$0xff]
    %v145 = vld [vmem:[#allocation7 + $0x2b0] sm:$0xff]
    %v146 = vld [vmem:[#allocation7 + $0x2b8] sm:$0xff]
    %v147 = vld [vmem:[#allocation7 + $0x2c0] sm:$0xff]
    %v148 = vld [vmem:[#allocation7 + $0x2c8] sm:$0xff]
    %v149 = vld [vmem:[#allocation7 + $0x2d0] sm:$0xff]
    %v150 = vld [vmem:[#allocation7 + $0x2d8] sm:$0xff]
    %v151 = vld [vmem:[#allocation7 + $0x2e0] sm:$0xff]
    %v152 = vld [vmem:[#allocation7 + $0x2e8] sm:$0xff]
    %v153 = vld [vmem:[#allocation7 + $0x2f0] sm:$0xff]
    %v154 = vld [vmem:[#allocation7 + $0x2f8] sm:$0xff]
    %v155 = vld [vmem:[#allocation7 + $0x300] sm:$0xff]
    %v156 = vld [vmem:[#allocation7 + $0x308] sm:$0xff]
    %v157 = vld [vmem:[#allocation7 + $0x310] sm:$0xff]
    %v158 = vld [vmem:[#allocation7 + $0x318] sm:$0xff]
    %v159 = vld [vmem:[#allocation7 + $0x320] sm:$0xff]
    %v160 = vld [vmem:[#allocation7 + $0x328] sm:$0xff]
    %v161 = vld [vmem:[#allocation7 + $0x330] sm:$0xff]
    %v162 = vld [vmem:[#allocation7 + $0x338] sm:$0xff]
    %v163 = vld [vmem:[#allocation7 + $0x340] sm:$0xff]
    %v164 = vld [vmem:[#allocation7 + $0x348] sm:$0xff]
    %v165 = vld [vmem:[#allocation7 + $0x350] sm:$0xff]
    %v166 = vld [vmem:[#allocation7 + $0x358] sm:$0xff]
    %v167 = vld [vmem:[#allocation7 + $0x360] sm:$0xff]
    %v168 = vld [vmem:[#allocation7 + $0x368] sm:$0xff]
    %v169 = vld [vmem:[#allocation7 + $0x370] sm:$0xff]
    %v170 = vld [vmem:[#allocation7 + $0x378] sm:$0xff]
    %v171 = vld [vmem:[#allocation7 + $0x380] sm:$0xff]
    %v172 = vld [vmem:[#allocation7 + $0x388] sm:$0xff]
    %v173 = vld [vmem:[#allocation7 + $0x390] sm:$0xff]
    %v174 = vld [vmem:[#allocation7 + $0x398] sm:$0xff]
    %v175 = vld [vmem:[#allocation7 + $0x3a0] sm:$0xff]
    %v176 = vld [vmem:[#allocation7 + $0x3a8] sm:$0xff]
    %v177 = vld [vmem:[#allocation7 + $0x3b0] sm:$0xff]
    %v178 = vld [vmem:[#allocation7 + $0x3b8] sm:$0xff]
    %v179 = vld [vmem:[#allocation7 + $0x3c0] sm:$0xff]
    %v180 = vld [vmem:[#allocation7 + $0x3c8] sm:$0xff]
    %v181 = vld [vmem:[#allocation7 + $0x3d0] sm:$0xff]
    %v182 = vld [vmem:[#allocation7 + $0x3d8] sm:$0xff]
    %v183 = vld [vmem:[#allocation7 + $0x3e0] sm:$0xff]
    %v184 = vld [vmem:[#allocation7 + $0x3e8] sm:$0xff]
    %v185 = vld [vmem:[#allocation7 + $0x3f0] sm:$0xff]
    %v186 = vld [vmem:[#allocation7 + $0x3f8] sm:$0xff]
    %v188 = vunpack.c.l.b16 %v58
    %v189 = vunpack.c.h.b16 %v58
    %v190 = vpack.c.b16 %v188, %v188
    %v191 = vpack.c.b16 %v189, %v189
    %v322 = vunpack.c.l.b16 %v59
    %v323 = vunpack.c.h.b16 %v59
    %v324 = vunpack.c.l.b16 %v60
    %v325 = vunpack.c.h.b16 %v60
    %v326 = vunpack.c.l.b16 %v61
    %v327 = vunpack.c.h.b16 %v61
    %v328 = vunpack.c.l.b16 %v62
    %v329 = vunpack.c.h.b16 %v62
    %v330 = vunpack.c.l.b16 %v63
    %v331 = vunpack.c.h.b16 %v63
    %v332 = vunpack.c.l.b16 %v64
    %v333 = vunpack.c.h.b16 %v64
    %v334 = vunpack.c.l.b16 %v65
    %v335 = vunpack.c.h.b16 %v65
    %v336 = vunpack.c.l.b16 %v66
    %v337 = vunpack.c.h.b16 %v66
    %v338 = vunpack.c.l.b16 %v67
    %v339 = vunpack.c.h.b16 %v67
    %v340 = vunpack.c.l.b16 %v68
    %v341 = vunpack.c.h.b16 %v68
    %v342 = vunpack.c.l.b16 %v69
    %v343 = vunpack.c.h.b16 %v69
    %v344 = vunpack.c.l.b16 %v70
    %v345 = vunpack.c.h.b16 %v70
    %v346 = vunpack.c.l.b16 %v71
    %v347 = vunpack.c.h.b16 %v71
    %v348 = vunpack.c.l.b16 %v72
    %v349 = vunpack.c.h.b16 %v72
    %v350 = vunpack.c.l.b16 %v73
    %v351 = vunpack.c.h.b16 %v73
    %v352 = vunpack.c.l.b16 %v74
    %v353 = vunpack.c.h.b16 %v74
    %v354 = vunpack.c.l.b16 %v75
    %v355 = vunpack.c.h.b16 %v75
    %v356 = vunpack.c.l.b16 %v76
    %v357 = vunpack.c.h.b16 %v76
    %v358 = vunpack.c.l.b16 %v77
    %v359 = vunpack.c.h.b16 %v77
    %v360 = vunpack.c.l.b16 %v78
    %v361 = vunpack.c.h.b16 %v78
    %v362 = vunpack.c.l.b16 %v79
    %v363 = vunpack.c.h.b16 %v79
    %v364 = vunpack.c.l.b16 %v80
    %v365 = vunpack.c.h.b16 %v80
    %v366 = vunpack.c.l.b16 %v81
    %v367 = vunpack.c.h.b16 %v81
    %v368 = vunpack.c.l.b16 %v82
    %v369 = vunpack.c.h.b16 %v82
    %v370 = vunpack.c.l.b16 %v83
    %v371 = vunpack.c.h.b16 %v83
    %v372 = vunpack.c.l.b16 %v84
    %v373 = vunpack.c.h.b16 %v84
    %v374 = vunpack.c.l.b16 %v85
    %v375 = vunpack.c.h.b16 %v85
    %v376 = vunpack.c.l.b16 %v86
    %v377 = vunpack.c.h.b16 %v86
    %v378 = vunpack.c.l.b16 %v87
    %v379 = vunpack.c.h.b16 %v87
    %v380 = vunpack.c.l.b16 %v88
    %v381 = vunpack.c.h.b16 %v88
    %v382 = vunpack.c.l.b16 %v89
    %v383 = vunpack.c.h.b16 %v89
    %v384 = vunpack.c.l.b16 %v90
    %v385 = vunpack.c.h.b16 %v90
    %v386 = vunpack.c.l.b16 %v91
    %v387 = vunpack.c.h.b16 %v91
    %v388 = vunpack.c.l.b16 %v92
    %v389 = vunpack.c.h.b16 %v92
    %v390 = vunpack.c.l.b16 %v93
    %v391 = vunpack.c.h.b16 %v93
    %v392 = vunpack.c.l.b16 %v94
    %v393 = vunpack.c.h.b16 %v94
    %v394 = vunpack.c.l.b16 %v95
    %v395 = vunpack.c.h.b16 %v95
    %v396 = vunpack.c.l.b16 %v96
    %v397 = vunpack.c.h.b16 %v96
    %v398 = vunpack.c.l.b16 %v97
    %v399 = vunpack.c.h.b16 %v97
    %v400 = vunpack.c.l.b16 %v98
    %v401 = vunpack.c.h.b16 %v98
    %v402 = vunpack.c.l.b16 %v99
    %v403 = vunpack.c.h.b16 %v99
    %v404 = vunpack.c.l.b16 %v100
    %v405 = vunpack.c.h.b16 %v100
    %v406 = vunpack.c.l.b16 %v101
    %v407 = vunpack.c.h.b16 %v101
    %v408 = vunpack.c.l.b16 %v102
    %v409 = vunpack.c.h.b16 %v102
    %v410 = vunpack.c.l.b16 %v103
    %v411 = vunpack.c.h.b16 %v103
    %v412 = vunpack.c.l.b16 %v104
    %v413 = vunpack.c.h.b16 %v104
    %v414 = vunpack.c.l.b16 %v105
    %v415 = vunpack.c.h.b16 %v105
    %v416 = vunpack.c.l.b16 %v106
    %v417 = vunpack.c.h.b16 %v106
    %v418 = vunpack.c.l.b16 %v107
    %v419 = vunpack.c.h.b16 %v107
    %v420 = vunpack.c.l.b16 %v108
    %v421 = vunpack.c.h.b16 %v108
    %v422 = vunpack.c.l.b16 %v109
    %v423 = vunpack.c.h.b16 %v109
    %v424 = vunpack.c.l.b16 %v110
    %v425 = vunpack.c.h.b16 %v110
    %v426 = vunpack.c.l.b16 %v111
    %v427 = vunpack.c.h.b16 %v111
    %v428 = vunpack.c.l.b16 %v112
    %v429 = vunpack.c.h.b16 %v112
    %v430 = vunpack.c.l.b16 %v113
    %v431 = vunpack.c.h.b16 %v113
    %v432 = vunpack.c.l.b16 %v114
    %v433 = vunpack.c.h.b16 %v114
    %v434 = vunpack.c.l.b16 %v115
    %v435 = vunpack.c.h.b16 %v115
    %v436 = vunpack.c.l.b16 %v116
    %v437 = vunpack.c.h.b16 %v116
    %v438 = vunpack.c.l.b16 %v117
    %v439 = vunpack.c.h.b16 %v117
    %v440 = vunpack.c.l.b16 %v118
    %v441 = vunpack.c.h.b16 %v118
    %v442 = vunpack.c.l.b16 %v119
    %v443 = vunpack.c.h.b16 %v119
    %v444 = vunpack.c.l.b16 %v120
    %v445 = vunpack.c.h.b16 %v120
    %v446 = vunpack.c.l.b16 %v121
    %v447 = vunpack.c.h.b16 %v121
    %v448 = vunpack.c.l.b16 %v122
    %v449 = vunpack.c.h.b16 %v122
    %v450 = vunpack.c.l.b16 %v123
    %v451 = vunpack.c.h.b16 %v123
    %v452 = vunpack.c.l.b16 %v124
    %v453 = vunpack.c.h.b16 %v124
    %v454 = vunpack.c.l.b16 %v125
    %v455 = vunpack.c.h.b16 %v125
    %v456 = vunpack.c.l.b16 %v126
    %v457 = vunpack.c.h.b16 %v126
    %v458 = vunpack.c.l.b16 %v127
    %v459 = vunpack.c.h.b16 %v127
    %v460 = vunpack.c.l.b16 %v128
    %v461 = vunpack.c.h.b16 %v128
    %v462 = vunpack.c.l.b16 %v129
    %v463 = vunpack.c.h.b16 %v129
    %v464 = vunpack.c.l.b16 %v130
    %v465 = vunpack.c.h.b16 %v130
    %v466 = vunpack.c.l.b16 %v131
    %v467 = vunpack.c.h.b16 %v131
    %v468 = vunpack.c.l.b16 %v132
    %v469 = vunpack.c.h.b16 %v132
    %v470 = vunpack.c.l.b16 %v133
    %v471 = vunpack.c.h.b16 %v133
    %v472 = vunpack.c.l.b16 %v134
    %v473 = vunpack.c.h.b16 %v134
    %v474 = vunpack.c.l.b16 %v135
    %v475 = vunpack.c.h.b16 %v135
    %v476 = vunpack.c.l.b16 %v136
    %v477 = vunpack.c.h.b16 %v136
    %v478 = vunpack.c.l.b16 %v137
    %v479 = vunpack.c.h.b16 %v137
    %v480 = vunpack.c.l.b16 %v138
    %v481 = vunpack.c.h.b16 %v138
    %v482 = vunpack.c.l.b16 %v139
    %v483 = vunpack.c.h.b16 %v139
    %v484 = vunpack.c.l.b16 %v140
    %v485 = vunpack.c.h.b16 %v140
    %v486 = vunpack.c.l.b16 %v141
    %v487 = vunpack.c.h.b16 %v141
    %v488 = vunpack.c.l.b16 %v142
    %v489 = vunpack.c.h.b16 %v142
    %v490 = vunpack.c.l.b16 %v143
    %v491 = vunpack.c.h.b16 %v143
    %v492 = vunpack.c.l.b16 %v144
    %v493 = vunpack.c.h.b16 %v144
    %v494 = vunpack.c.l.b16 %v145
    %v495 = vunpack.c.h.b16 %v145
    %v496 = vunpack.c.l.b16 %v146
    %v497 = vunpack.c.h.b16 %v146
    %v498 = vunpack.c.l.b16 %v147
    %v499 = vunpack.c.h.b16 %v147
    %v500 = vunpack.c.l.b16 %v148
    %v501 = vunpack.c.h.b16 %v148
    %v502 = vunpack.c.l.b16 %v149
    %v503 = vunpack.c.h.b16 %v149
    %v504 = vunpack.c.l.b16 %v150
    %v505 = vunpack.c.h.b16 %v150
    %v506 = vunpack.c.l.b16 %v151
    %v507 = vunpack.c.h.b16 %v151
    %v508 = vunpack.c.l.b16 %v152
    %v509 = vunpack.c.h.b16 %v152
    %v510 = vunpack.c.l.b16 %v153
    %v511 = vunpack.c.h.b16 %v153
    %v512 = vunpack.c.l.b16 %v154
    %v513 = vunpack.c.h.b16 %v154
    %v514 = vunpack.c.l.b16 %v155
    %v515 = vunpack.c.h.b16 %v155
    %v516 = vunpack.c.l.b16 %v156
    %v517 = vunpack.c.h.b16 %v156
    %v518 = vunpack.c.l.b16 %v157
    %v519 = vunpack.c.h.b16 %v157
    %v520 = vunpack.c.l.b16 %v158
    %v521 = vunpack.c.h.b16 %v158
    %v522 = vunpack.c.l.b16 %v159
    %v523 = vunpack.c.h.b16 %v159
    %v524 = vunpack.c.l.b16 %v160
    %v525 = vunpack.c.h.b16 %v160
    %v526 = vunpack.c.l.b16 %v161
    %v527 = vunpack.c.h.b16 %v161
    %v528 = vunpack.c.l.b16 %v162
    %v529 = vunpack.c.h.b16 %v162
    %v530 = vunpack.c.l.b16 %v163
    %v531 = vunpack.c.h.b16 %v163
    %v532 = vunpack.c.l.b16 %v164
    %v533 = vunpack.c.h.b16 %v164
    %v534 = vunpack.c.l.b16 %v165
    %v535 = vunpack.c.h.b16 %v165
    %v536 = vunpack.c.l.b16 %v166
    %v537 = vunpack.c.h.b16 %v166
    %v538 = vunpack.c.l.b16 %v167
    %v539 = vunpack.c.h.b16 %v167
    %v540 = vunpack.c.l.b16 %v168
    %v541 = vunpack.c.h.b16 %v168
    %v542 = vunpack.c.l.b16 %v169
    %v543 = vunpack.c.h.b16 %v169
    %v544 = vunpack.c.l.b16 %v170
    %v545 = vunpack.c.h.b16 %v170
    %v546 = vunpack.c.l.b16 %v171
    %v547 = vunpack.c.h.b16 %v171
    %v548 = vunpack.c.l.b16 %v172
    %v549 = vunpack.c.h.b16 %v172
    %v550 = vunpack.c.l.b16 %v173
    %v551 = vunpack.c.h.b16 %v173
    %v552 = vunpack.c.l.b16 %v174
    %v553 = vunpack.c.h.b16 %v174
    %v554 = vunpack.c.l.b16 %v175
    %v555 = vunpack.c.h.b16 %v175
    %v556 = vunpack.c.l.b16 %v176
    %v557 = vunpack.c.h.b16 %v176
    %v558 = vunpack.c.l.b16 %v177
    %v559 = vunpack.c.h.b16 %v177
    %v560 = vunpack.c.l.b16 %v178
    %v561 = vunpack.c.h.b16 %v178
    %v562 = vunpack.c.l.b16 %v179
    %v563 = vunpack.c.h.b16 %v179
    %v564 = vunpack.c.l.b16 %v180
    %v565 = vunpack.c.h.b16 %v180
    %v566 = vunpack.c.l.b16 %v181
    %v567 = vunpack.c.h.b16 %v181
    %v568 = vunpack.c.l.b16 %v182
    %v569 = vunpack.c.h.b16 %v182
    %v570 = vunpack.c.l.b16 %v183
    %v571 = vunpack.c.h.b16 %v183
    %v572 = vunpack.c.l.b16 %v184
    %v573 = vunpack.c.h.b16 %v184
    %v574 = vunpack.c.l.b16 %v185
    %v575 = vunpack.c.h.b16 %v185
    %v576 = vunpack.c.l.b16 %v186
    %v577 = vunpack.c.h.b16 %v186
    %v578 = vpack.c.b16 %v330, %v322
    %v579 = vpack.c.b16 %v331, %v323
    %v580 = vpack.c.b16 %v332, %v324
    %v581 = vpack.c.b16 %v333, %v325
    %v582 = vpack.c.b16 %v334, %v326
    %v583 = vpack.c.b16 %v335, %v327
    %v584 = vpack.c.b16 %v336, %v328
    %v585 = vpack.c.b16 %v337, %v329
    %v586 = vpack.c.b16 %v346, %v338
    %v587 = vpack.c.b16 %v347, %v339
    %v588 = vpack.c.b16 %v348, %v340
    %v589 = vpack.c.b16 %v349, %v341
    %v590 = vpack.c.b16 %v350, %v342
    %v591 = vpack.c.b16 %v351, %v343
    %v592 = vpack.c.b16 %v352, %v344
    %v593 = vpack.c.b16 %v353, %v345
    %v594 = vpack.c.b16 %v362, %v354
    %v595 = vpack.c.b16 %v363, %v355
    %v596 = vpack.c.b16 %v364, %v356
    %v597 = vpack.c.b16 %v365, %v357
    %v598 = vpack.c.b16 %v366, %v358
    %v599 = vpack.c.b16 %v367, %v359
    %v600 = vpack.c.b16 %v368, %v360
    %v601 = vpack.c.b16 %v369, %v361
    %v602 = vpack.c.b16 %v378, %v370
    %v603 = vpack.c.b16 %v379, %v371
    %v604 = vpack.c.b16 %v380, %v372
    %v605 = vpack.c.b16 %v381, %v373
    %v606 = vpack.c.b16 %v382, %v374
    %v607 = vpack.c.b16 %v383, %v375
    %v608 = vpack.c.b16 %v384, %v376
    %v609 = vpack.c.b16 %v385, %v377
    %v610 = vpack.c.b16 %v394, %v386
    %v611 = vpack.c.b16 %v395, %v387
    %v612 = vpack.c.b16 %v396, %v388
    %v613 = vpack.c.b16 %v397, %v389
    %v614 = vpack.c.b16 %v398, %v390
    %v615 = vpack.c.b16 %v399, %v391
    %v616 = vpack.c.b16 %v400, %v392
    %v617 = vpack.c.b16 %v401, %v393
    %v618 = vpack.c.b16 %v410, %v402
    %v619 = vpack.c.b16 %v411, %v403
    %v620 = vpack.c.b16 %v412, %v404
    %v621 = vpack.c.b16 %v413, %v405
    %v622 = vpack.c.b16 %v414, %v406
    %v623 = vpack.c.b16 %v415, %v407
    %v624 = vpack.c.b16 %v416, %v408
    %v625 = vpack.c.b16 %v417, %v409
    %v626 = vpack.c.b16 %v426, %v418
    %v627 = vpack.c.b16 %v427, %v419
    %v628 = vpack.c.b16 %v428, %v420
    %v629 = vpack.c.b16 %v429, %v421
    %v630 = vpack.c.b16 %v430, %v422
    %v631 = vpack.c.b16 %v431, %v423
    %v632 = vpack.c.b16 %v432, %v424
    %v633 = vpack.c.b16 %v433, %v425
    %v634 = vpack.c.b16 %v442, %v434
    %v635 = vpack.c.b16 %v443, %v435
    %v636 = vpack.c.b16 %v444, %v436
    %v637 = vpack.c.b16 %v445, %v437
    %v638 = vpack.c.b16 %v446, %v438
    %v639 = vpack.c.b16 %v447, %v439
    %v640 = vpack.c.b16 %v448, %v440
    %v641 = vpack.c.b16 %v449, %v441
    %v642 = vpack.c.b16 %v458, %v450
    %v643 = vpack.c.b16 %v459, %v451
    %v644 = vpack.c.b16 %v460, %v452
    %v645 = vpack.c.b16 %v461, %v453
    %v646 = vpack.c.b16 %v462, %v454
    %v647 = vpack.c.b16 %v463, %v455
    %v648 = vpack.c.b16 %v464, %v456
    %v649 = vpack.c.b16 %v465, %v457
    %v650 = vpack.c.b16 %v474, %v466
    %v651 = vpack.c.b16 %v475, %v467
    %v652 = vpack.c.b16 %v476, %v468
    %v653 = vpack.c.b16 %v477, %v469
    %v654 = vpack.c.b16 %v478, %v470
    %v655 = vpack.c.b16 %v479, %v471
    %v656 = vpack.c.b16 %v480, %v472
    %v657 = vpack.c.b16 %v481, %v473
    %v658 = vpack.c.b16 %v490, %v482
    %v659 = vpack.c.b16 %v491, %v483
    %v660 = vpack.c.b16 %v492, %v484
    %v661 = vpack.c.b16 %v493, %v485
    %v662 = vpack.c.b16 %v494, %v486
    %v663 = vpack.c.b16 %v495, %v487
    %v664 = vpack.c.b16 %v496, %v488
    %v665 = vpack.c.b16 %v497, %v489
    %v666 = vpack.c.b16 %v506, %v498
    %v667 = vpack.c.b16 %v507, %v499
    %v668 = vpack.c.b16 %v508, %v500
    %v669 = vpack.c.b16 %v509, %v501
    %v670 = vpack.c.b16 %v510, %v502
    %v671 = vpack.c.b16 %v511, %v503
    %v672 = vpack.c.b16 %v512, %v504
    %v673 = vpack.c.b16 %v513, %v505
    %v674 = vpack.c.b16 %v522, %v514
    %v675 = vpack.c.b16 %v523, %v515
    %v676 = vpack.c.b16 %v524, %v516
    %v677 = vpack.c.b16 %v525, %v517
    %v678 = vpack.c.b16 %v526, %v518
    %v679 = vpack.c.b16 %v527, %v519
    %v680 = vpack.c.b16 %v528, %v520
    %v681 = vpack.c.b16 %v529, %v521
    %v682 = vpack.c.b16 %v538, %v530
    %v683 = vpack.c.b16 %v539, %v531
    %v684 = vpack.c.b16 %v540, %v532
    %v685 = vpack.c.b16 %v541, %v533
    %v686 = vpack.c.b16 %v542, %v534
    %v687 = vpack.c.b16 %v543, %v535
    %v688 = vpack.c.b16 %v544, %v536
    %v689 = vpack.c.b16 %v545, %v537
    %v690 = vpack.c.b16 %v554, %v546
    %v691 = vpack.c.b16 %v555, %v547
    %v692 = vpack.c.b16 %v556, %v548
    %v693 = vpack.c.b16 %v557, %v549
    %v694 = vpack.c.b16 %v558, %v550
    %v695 = vpack.c.b16 %v559, %v551
    %v696 = vpack.c.b16 %v560, %v552
    %v697 = vpack.c.b16 %v561, %v553
    %v698 = vpack.c.b16 %v570, %v562
    %v699 = vpack.c.b16 %v571, %v563
    %v700 = vpack.c.b16 %v572, %v564
    %v701 = vpack.c.b16 %v573, %v565
    %v702 = vpack.c.b16 %v574, %v566
    %v703 = vpack.c.b16 %v575, %v567
    %v704 = vpack.c.b16 %v576, %v568
    %v705 = vpack.c.b16 %v577, %v569
    %834 = vmatpush.bf16.msra.mxu0 %v634
    %835 = vmatpush.bf16.msra.mxu0 %v626
    %836 = vmatpush.bf16.msra.mxu0 %v618
    %837 = vmatpush.bf16.msra.mxu0 %v610
    %838 = vmatpush.bf16.msra.mxu0 %v602
    %839 = vmatpush.bf16.msra.mxu0 %v594
    %840 = vmatpush.bf16.msra.mxu0 %v586
    %841 = vmatpush.bf16.msra.mxu0 %v578
    %842 = vmatmul.bf16.gmra.mxu0 %v190
    %v843 = vpop.f32.mrf.mxu0
    %v844 = vadd.f32 0.0, %v843
    %v845 = vpop.f32.mrf.mxu0
    %846 = vdwg.mxu0
    %847 = vmatpush.bf16.msra.mxu0 %v698
    %848 = vmatpush.bf16.msra.mxu0 %v690
    %849 = vmatpush.bf16.msra.mxu0 %v682
    %850 = vmatpush.bf16.msra.mxu0 %v674
    %851 = vmatpush.bf16.msra.mxu0 %v666
    %852 = vmatpush.bf16.msra.mxu0 %v658
    %853 = vmatpush.bf16.msra.mxu0 %v650
    %854 = vmatpush.bf16.msra.mxu0 %v642
    %855 = vmatmul.bf16.gmra.mxu0 %v191
    %v856 = vpop.f32.mrf.mxu0
    %v857 = vadd.f32 %v844, %v856
    %v858 = vpop.f32.mrf.mxu0
    %859 = vdwg.mxu0
    %860 = vmatpush.bf16.msra.mxu0 %v635
    %861 = vmatpush.bf16.msra.mxu0 %v627
    %862 = vmatpush.bf16.msra.mxu0 %v619
    %863 = vmatpush.bf16.msra.mxu0 %v611
    %864 = vmatpush.bf16.msra.mxu0 %v603
    %865 = vmatpush.bf16.msra.mxu0 %v595
    %866 = vmatpush.bf16.msra.mxu0 %v587
    %867 = vmatpush.bf16.msra.mxu0 %v579
    %868 = vmatmul.bf16.gmra.mxu0 %v190
    %v869 = vpop.f32.mrf.mxu0
    %v870 = vadd.f32 0.0, %v869
    %v871 = vpop.f32.mrf.mxu0
    %872 = vdwg.mxu0
    %873 = vmatpush.bf16.msra.mxu0 %v699
    %874 = vmatpush.bf16.msra.mxu0 %v691
    %875 = vmatpush.bf16.msra.mxu0 %v683
    %876 = vmatpush.bf16.msra.mxu0 %v675
    %877 = vmatpush.bf16.msra.mxu0 %v667
    %878 = vmatpush.bf16.msra.mxu0 %v659
    %879 = vmatpush.bf16.msra.mxu0 %v651
    %880 = vmatpush.bf16.msra.mxu0 %v643
    %881 = vmatmul.bf16.gmra.mxu0 %v191
    %v882 = vpop.f32.mrf.mxu0
    %v883 = vadd.f32 %v870, %v882
    %v884 = vpop.f32.mrf.mxu0
    %885 = vdwg.mxu0
    %886 = vmatpush.bf16.msra.mxu0 %v636
    %887 = vmatpush.bf16.msra.mxu0 %v628
    %888 = vmatpush.bf16.msra.mxu0 %v620
    %889 = vmatpush.bf16.msra.mxu0 %v612
    %890 = vmatpush.bf16.msra.mxu0 %v604
    %891 = vmatpush.bf16.msra.mxu0 %v596
    %892 = vmatpush.bf16.msra.mxu0 %v588
    %893 = vmatpush.bf16.msra.mxu0 %v580
    %894 = vmatmul.bf16.gmra.mxu0 %v190
    %v895 = vpop.f32.mrf.mxu0
    %v896 = vadd.f32 0.0, %v895
    %v897 = vpop.f32.mrf.mxu0
    %898 = vdwg.mxu0
    %899 = vmatpush.bf16.msra.mxu0 %v700
    %900 = vmatpush.bf16.msra.mxu0 %v692
    %901 = vmatpush.bf16.msra.mxu0 %v684
    %902 = vmatpush.bf16.msra.mxu0 %v676
    %903 = vmatpush.bf16.msra.mxu0 %v668
    %904 = vmatpush.bf16.msra.mxu0 %v660
    %905 = vmatpush.bf16.msra.mxu0 %v652
    %906 = vmatpush.bf16.msra.mxu0 %v644
    %907 = vmatmul.bf16.gmra.mxu0 %v191
    %v908 = vpop.f32.mrf.mxu0
    %v909 = vadd.f32 %v896, %v908
    %v910 = vpop.f32.mrf.mxu0
    %911 = vdwg.mxu0
    %912 = vmatpush.bf16.msra.mxu0 %v637
    %913 = vmatpush.bf16.msra.mxu0 %v629
    %914 = vmatpush.bf16.msra.mxu0 %v621
    %915 = vmatpush.bf16.msra.mxu0 %v613
    %916 = vmatpush.bf16.msra.mxu0 %v605
    %917 = vmatpush.bf16.msra.mxu0 %v597
    %918 = vmatpush.bf16.msra.mxu0 %v589
    %919 = vmatpush.bf16.msra.mxu0 %v581
    %920 = vmatmul.bf16.gmra.mxu0 %v190
    %v921 = vpop.f32.mrf.mxu0
    %v922 = vadd.f32 0.0, %v921
    %v923 = vpop.f32.mrf.mxu0
    %924 = vdwg.mxu0
    %925 = vmatpush.bf16.msra.mxu0 %v701
    %926 = vmatpush.bf16.msra.mxu0 %v693
    %927 = vmatpush.bf16.msra.mxu0 %v685
    %928 = vmatpush.bf16.msra.mxu0 %v677
    %929 = vmatpush.bf16.msra.mxu0 %v669
    %930 = vmatpush.bf16.msra.mxu0 %v661
    %931 = vmatpush.bf16.msra.mxu0 %v653
    %932 = vmatpush.bf16.msra.mxu0 %v645
    %933 = vmatmul.bf16.gmra.mxu0 %v191
    %v934 = vpop.f32.mrf.mxu0
    %v935 = vadd.f32 %v922, %v934
    %v936 = vpop.f32.mrf.mxu0
    %937 = vdwg.mxu0
    %938 = vmatpush.bf16.msra.mxu0 %v638
    %939 = vmatpush.bf16.msra.mxu0 %v630
    %940 = vmatpush.bf16.msra.mxu0 %v622
    %941 = vmatpush.bf16.msra.mxu0 %v614
    %942 = vmatpush.bf16.msra.mxu0 %v606
    %943 = vmatpush.bf16.msra.mxu0 %v598
    %944 = vmatpush.bf16.msra.mxu0 %v590
    %945 = vmatpush.bf16.msra.mxu0 %v582
    %946 = vmatmul.bf16.gmra.mxu0 %v190
    %v947 = vpop.f32.mrf.mxu0
    %v948 = vadd.f32 0.0, %v947
    %v949 = vpop.f32.mrf.mxu0
    %950 = vdwg.mxu0
    %951 = vmatpush.bf16.msra.mxu0 %v702
    %952 = vmatpush.bf16.msra.mxu0 %v694
    %953 = vmatpush.bf16.msra.mxu0 %v686
    %954 = vmatpush.bf16.msra.mxu0 %v678
    %955 = vmatpush.bf16.msra.mxu0 %v670
    %956 = vmatpush.bf16.msra.mxu0 %v662
    %957 = vmatpush.bf16.msra.mxu0 %v654
    %958 = vmatpush.bf16.msra.mxu0 %v646
    %959 = vmatmul.bf16.gmra.mxu0 %v191
    %v960 = vpop.f32.mrf.mxu0
    %v961 = vadd.f32 %v948, %v960
    %v962 = vpop.f32.mrf.mxu0
    %963 = vdwg.mxu0
    %964 = vmatpush.bf16.msra.mxu0 %v639
    %965 = vmatpush.bf16.msra.mxu0 %v631
    %966 = vmatpush.bf16.msra.mxu0 %v623
    %967 = vmatpush.bf16.msra.mxu0 %v615
    %968 = vmatpush.bf16.msra.mxu0 %v607
    %969 = vmatpush.bf16.msra.mxu0 %v599
    %970 = vmatpush.bf16.msra.mxu0 %v591
    %971 = vmatpush.bf16.msra.mxu0 %v583
    %972 = vmatmul.bf16.gmra.mxu0 %v190
    %v973 = vpop.f32.mrf.mxu0
    %v974 = vadd.f32 0.0, %v973
    %v975 = vpop.f32.mrf.mxu0
    %976 = vdwg.mxu0
    %977 = vmatpush.bf16.msra.mxu0 %v703
    %978 = vmatpush.bf16.msra.mxu0 %v695
    %979 = vmatpush.bf16.msra.mxu0 %v687
    %980 = vmatpush.bf16.msra.mxu0 %v679
    %981 = vmatpush.bf16.msra.mxu0 %v671
    %982 = vmatpush.bf16.msra.mxu0 %v663
    %983 = vmatpush.bf16.msra.mxu0 %v655
    %984 = vmatpush.bf16.msra.mxu0 %v647
    %985 = vmatmul.bf16.gmra.mxu0 %v191
    %v986 = vpop.f32.mrf.mxu0
    %v987 = vadd.f32 %v974, %v986
    %v988 = vpop.f32.mrf.mxu0
    %989 = vdwg.mxu0
    %990 = vmatpush.bf16.msra.mxu0 %v640
    %991 = vmatpush.bf16.msra.mxu0 %v632
    %992 = vmatpush.bf16.msra.mxu0 %v624
    %993 = vmatpush.bf16.msra.mxu0 %v616
    %994 = vmatpush.bf16.msra.mxu0 %v608
    %995 = vmatpush.bf16.msra.mxu0 %v600
    %996 = vmatpush.bf16.msra.mxu0 %v592
    %997 = vmatpush.bf16.msra.mxu0 %v584
    %998 = vmatmul.bf16.gmra.mxu0 %v190
    %v999 = vpop.f32.mrf.mxu0
    %v1000 = vadd.f32 0.0, %v999
    %v1001 = vpop.f32.mrf.mxu0
    %1002 = vdwg.mxu0
    %1003 = vmatpush.bf16.msra.mxu0 %v704
    %1004 = vmatpush.bf16.msra.mxu0 %v696
    %1005 = vmatpush.bf16.msra.mxu0 %v688
    %1006 = vmatpush.bf16.msra.mxu0 %v680
    %1007 = vmatpush.bf16.msra.mxu0 %v672
    %1008 = vmatpush.bf16.msra.mxu0 %v664
    %1009 = vmatpush.bf16.msra.mxu0 %v656
    %1010 = vmatpush.bf16.msra.mxu0 %v648
    %1011 = vmatmul.bf16.gmra.mxu0 %v191
    %v1012 = vpop.f32.mrf.mxu0
    %v1013 = vadd.f32 %v1000, %v1012
    %v1014 = vpop.f32.mrf.mxu0
    %1015 = vdwg.mxu0
    %1016 = vmatpush.bf16.msra.mxu0 %v641
    %1017 = vmatpush.bf16.msra.mxu0 %v633
    %1018 = vmatpush.bf16.msra.mxu0 %v625
    %1019 = vmatpush.bf16.msra.mxu0 %v617
    %1020 = vmatpush.bf16.msra.mxu0 %v609
    %1021 = vmatpush.bf16.msra.mxu0 %v601
    %1022 = vmatpush.bf16.msra.mxu0 %v593
    %1023 = vmatpush.bf16.msra.mxu0 %v585
    %1024 = vmatmul.bf16.gmra.mxu0 %v190
    %v1025 = vpop.f32.mrf.mxu0
    %v1026 = vadd.f32 0.0, %v1025
    %v1027 = vpop.f32.mrf.mxu0
    %1028 = vdwg.mxu0
    %1029 = vmatpush.bf16.msra.mxu0 %v705
    %1030 = vmatpush.bf16.msra.mxu0 %v697
    %1031 = vmatpush.bf16.msra.mxu0 %v689
    %1032 = vmatpush.bf16.msra.mxu0 %v681
    %1033 = vmatpush.bf16.msra.mxu0 %v673
    %1034 = vmatpush.bf16.msra.mxu0 %v665
    %1035 = vmatpush.bf16.msra.mxu0 %v657
    %1036 = vmatpush.bf16.msra.mxu0 %v649
    %1037 = vmatmul.bf16.gmra.mxu0 %v191
    %v1038 = vpop.f32.mrf.mxu0
    %v1039 = vadd.f32 %v1026, %v1038
    %v1040 = vpop.f32.mrf.mxu0
    %1041 = vdwg.mxu0
    %v1042 = vld [vmem:[#allocation5] sm:$0xff]
    %v1043 = vld [vmem:[#allocation5 + $0x8] sm:$0xff]
    %v1044 = vld [vmem:[#allocation5 + $0x10] sm:$0xff]
    %v1045 = vld [vmem:[#allocation5 + $0x18] sm:$0xff]
    %v1046 = vld [vmem:[#allocation5 + $0x20] sm:$0xff]
    %v1047 = vld [vmem:[#allocation5 + $0x28] sm:$0xff]
    %v1048 = vld [vmem:[#allocation5 + $0x30] sm:$0xff]
    %v1049 = vld [vmem:[#allocation5 + $0x38] sm:$0xff]
    %v1050 = vadd.f32 %v1042, %v857
    %v1051 = vadd.f32 %v1043, %v883
    %v1052 = vadd.f32 %v1044, %v909
    %v1053 = vadd.f32 %v1045, %v935
    %v1054 = vadd.f32 %v1046, %v961
    %v1055 = vadd.f32 %v1047, %v987
    %v1056 = vadd.f32 %v1048, %v1013
    %v1057 = vadd.f32 %v1049, %v1039
    %1058 = vst [vmem:[#allocation8] sm:$0xff] %v1050
    %1059 = vst [vmem:[#allocation8 + $0x8] sm:$0xff] %v1051
    %1060 = vst [vmem:[#allocation8 + $0x10] sm:$0xff] %v1052
    %1061 = vst [vmem:[#allocation8 + $0x18] sm:$0xff] %v1053
    %1062 = vst [vmem:[#allocation8 + $0x20] sm:$0xff] %v1054
    %1063 = vst [vmem:[#allocation8 + $0x28] sm:$0xff] %v1055
    %1064 = vst [vmem:[#allocation8 + $0x30] sm:$0xff] %v1056
    %1065 = vst [vmem:[#allocation8 + $0x38] sm:$0xff] %v1057
    // Predicated region
    $region26: #{tpu_custom_call.1} parent=1 // pred_check
      _
    $region27: #{tpu_custom_call.1} parent=1 // pred_check_branch
      %1067 = sbr.rel (0) target = $region29
    $region28: #{tpu_custom_call.1} parent=1 // pred_region
      %1069 = vsyncadd [#allocation4], 0
      %s1071 = sshll.u32 [#allocation8], 4
      %s1072 = int_to_ptr.vmem [resolvable:$true] %s1071
      %s1073 = sshll.u32 %s3, 4
      %s1074 = int_to_ptr.hbm [resolvable:$true] %s1073
      %1076 = dma.vmem_to_hbm [thread:$0]  %s1072, 1024, %s1074, [#allocation4]
    $region29: #{tpu_custom_call.1} parent=1 // pred_fallthru
      _
    // Predicated region
    $region30: #{tpu_custom_call.1} parent=1 // pred_check
      _
    $region31: #{tpu_custom_call.1} parent=1 // pred_check_branch
      %1078 = sbr.rel (0) target = $region33
    $region32: #{tpu_custom_call.1} parent=1 // pred_region
      %1080 = dma.done [#allocation4], 1024
    $region33: #{tpu_custom_call.1} parent=1 // pred_fallthru
      _
    %1081 = vsyncpa [#allocation3], 1
    %1082 = vsyncpa [#allocation6], 1
    %1083 = vsyncpa [#allocation4], 1

</llo_original>
